<compile_context>
chip_gen: v5e
topology: v5e:2x2
jax: 0.10.0
libtpu: 0.0.40
codegen_flags: <defaults>
</compile_context>

<pallas_src>
import jax
import jax.numpy as jnp
from jax.experimental import pallas as pl
from jax.experimental.pallas import tpu as pltpu

INPUT_FEATURES = 2
LAYER1_NEURONS = 3
LAYER2_NEURONS = 3
OUTPUT_NEURONS = 1


def mlp_kernel(x_ref, w1_ref, b1_ref, w2_ref, b2_ref, w3_ref, b3_ref, o_ref):
    # x_ref: (INPUT_FEATURES, TB) VMEM block, batch on the lane (last) axis.
    # w*/b* refs live in SMEM; read as scalars and splat onto lane-dense vregs.
    x = x_ref[...]
    rows = [x[k:k + 1, :] for k in range(INPUT_FEATURES)]  # each (1, TB)

    def dense_tanh(in_rows, w_ref, b_ref, fan_in, fan_out):
        outs = []
        for j in range(fan_out):                      # statically unrolled
            acc = in_rows[0] * w_ref[0, j] + b_ref[j]
            for k in range(1, fan_in):
                acc = acc + in_rows[k] * w_ref[k, j]  # VPU FMA, lane-dense
            outs.append(jnp.tanh(acc))                # EUP slot, ~free
        return outs

    h1 = dense_tanh(rows, w1_ref, b1_ref, INPUT_FEATURES, LAYER1_NEURONS)
    h2 = dense_tanh(h1, w2_ref, b2_ref, LAYER1_NEURONS, LAYER2_NEURONS)
    out = dense_tanh(h2, w3_ref, b3_ref, LAYER2_NEURONS, OUTPUT_NEURONS)
    o_ref[...] = jnp.concatenate(out, axis=0).astype(o_ref.dtype)


def neural_network_forward(x, params, *, batch_tile=128):
    """x: (batch, INPUT_FEATURES) f32 -> (batch, OUTPUT_NEURONS) f32."""
    w1, b1, w2, b2, w3, b3 = params
    batch = x.shape[0]

    # Lane-major layout: batch on the last axis (layout plumbing, not compute).
    xt = x.T  # (INPUT_FEATURES, batch)

    # Tile the batch axis; tile must be a multiple of 128 (lane width) and
    # divide the batch.  Otherwise fall back to one full-batch block (block
    # shape == full array dim satisfies the (8,128) rule).
    if batch % batch_tile != 0 or batch_tile % 128 != 0:
        batch_tile = batch
    grid = (batch // batch_tile,)

    smem_spec = pl.BlockSpec(memory_space=pltpu.MemorySpace.SMEM)

    out_t = pl.pallas_call(
        mlp_kernel,
        out_shape=jax.ShapeDtypeStruct((OUTPUT_NEURONS, batch), jnp.float32),
        grid=grid,
        in_specs=[
            pl.BlockSpec((INPUT_FEATURES, batch_tile), lambda i: (0, i)),
            smem_spec, smem_spec,   # w1, b1
            smem_spec, smem_spec,   # w2, b2
            smem_spec, smem_spec,   # w3, b3
        ],
        out_specs=pl.BlockSpec((OUTPUT_NEURONS, batch_tile), lambda i: (0, i)),
        compiler_params=pltpu.CompilerParams(
            dimension_semantics=("parallel",)),   # v7x: shard batch over 2 TCs
    )(xt, w1, b1, w2, b2, w3, b3)

    return out_t.T  # back to (batch, OUTPUT_NEURONS)


def init_params(key):
    # Deterministic init mimicking nn.Linear's uniform(-1/sqrt(fan_in), 1/sqrt(fan_in)).
    ks = jax.random.split(key, 6)

    def linear(kw, kb, fan_in, fan_out):
        bound = 1.0 / jnp.sqrt(fan_in)
        w = jax.random.uniform(kw, (fan_in, fan_out), jnp.float32, -bound, bound)
        b = jax.random.uniform(kb, (fan_out,), jnp.float32, -bound, bound)
        return w, b

    w1, b1 = linear(ks[0], ks[1], INPUT_FEATURES, LAYER1_NEURONS)
    w2, b2 = linear(ks[2], ks[3], LAYER1_NEURONS, LAYER2_NEURONS)
    w3, b3 = linear(ks[4], ks[5], LAYER2_NEURONS, OUTPUT_NEURONS)
    return (w1, b1, w2, b2, w3, b3)


if __name__ == "__main__":
    key = jax.random.PRNGKey(0)
    pkey, xkey = jax.random.split(key)
    params = init_params(pkey)

    # Batch chosen so the kernel actually exercises the tiled/pipelined path
    # (grid of 4 tiles of 128); total data is still only a few KiB.
    batch = 512
    x = jax.random.normal(xkey, (batch, INPUT_FEATURES), jnp.float32)

    out = neural_network_forward(x, params, batch_tile=128)
    out = jax.block_until_ready(out)

    # Pure-JAX reference of the same math (tanh after every layer, incl. output).
    w1, b1, w2, b2, w3, b3 = params
    ref = jnp.tanh(jnp.tanh(jnp.tanh(x @ w1 + b1) @ w2 + b2) @ w3 + b3)
    assert out.shape == (batch, OUTPUT_NEURONS)
    assert jnp.allclose(out, ref, atol=1e-5), "mismatch vs reference"

    print("KERNEL_OK")
</pallas_src>

<mosaic_0001>
module attributes {stable_mosaic.version = 11 : i64} {
  func.func @mlp_kernel(%arg0: i32, %arg1: memref<2x128xf32, #tpu.memory_space<vmem>>, %arg2: memref<2x3xf32, #tpu.memory_space<smem>>, %arg3: memref<3xf32, #tpu.memory_space<smem>>, %arg4: memref<3x3xf32, #tpu.memory_space<smem>>, %arg5: memref<3xf32, #tpu.memory_space<smem>>, %arg6: memref<3x1xf32, #tpu.memory_space<smem>>, %arg7: memref<1xf32, #tpu.memory_space<smem>>, %arg8: memref<1x128xf32, #tpu.memory_space<vmem>>) attributes {dimension_semantics = [#tpu.dimension_semantics<parallel>], iteration_bounds = array<i64: 4>, scalar_prefetch = 0 : i64, scratch_operands = 0 : i64, tpu.core_type = #tpu.core_type<tc>, window_params = [{transform_indices = @transform_0, window_bounds = array<i64: 2, 128>}, {transform_indices = @transform_1, window_bounds = array<i64: 2, 3>}, {transform_indices = @transform_2, window_bounds = array<i64: 3>}, {transform_indices = @transform_3, window_bounds = array<i64: 3, 3>}, {transform_indices = @transform_4, window_bounds = array<i64: 3>}, {transform_indices = @transform_5, window_bounds = array<i64: 3, 1>}, {transform_indices = @transform_6, window_bounds = array<i64: 1>}, {transform_indices = @transform_7, window_bounds = array<i64: 1, 128>}]} {
    %c0 = arith.constant 0 : index
    %c0_0 = arith.constant 0 : index
    %0 = vector.load %arg1[%c0, %c0_0] : memref<2x128xf32, #tpu.memory_space<vmem>>, vector<2x128xf32>
    %1 = vector.extract_strided_slice %0 {offsets = [0, 0], sizes = [1, 128], strides = [1, 1]} : vector<2x128xf32> to vector<1x128xf32>
    %2 = vector.extract_strided_slice %0 {offsets = [1, 0], sizes = [1, 128], strides = [1, 1]} : vector<2x128xf32> to vector<1x128xf32>
    %c0_1 = arith.constant 0 : index
    %c0_2 = arith.constant 0 : index
    %3 = memref.load %arg2[%c0_1, %c0_2] : memref<2x3xf32, #tpu.memory_space<smem>>
    %4 = vector.broadcast %3 : f32 to vector<1x128xf32>
    %5 = arith.mulf %1, %4 : vector<1x128xf32>
    %c0_3 = arith.constant 0 : index
    %6 = memref.load %arg3[%c0_3] : memref<3xf32, #tpu.memory_space<smem>>
    %7 = vector.broadcast %6 : f32 to vector<1x128xf32>
    %8 = arith.addf %5, %7 : vector<1x128xf32>
    %c1 = arith.constant 1 : index
    %c0_4 = arith.constant 0 : index
    %9 = memref.load %arg2[%c1, %c0_4] : memref<2x3xf32, #tpu.memory_space<smem>>
    %10 = vector.broadcast %9 : f32 to vector<1x128xf32>
    %11 = arith.mulf %2, %10 : vector<1x128xf32>
    %12 = arith.addf %8, %11 : vector<1x128xf32>
    %13 = math.tanh %12 : vector<1x128xf32>
    %c0_5 = arith.constant 0 : index
    %c1_6 = arith.constant 1 : index
    %14 = memref.load %arg2[%c0_5, %c1_6] : memref<2x3xf32, #tpu.memory_space<smem>>
    %15 = vector.broadcast %14 : f32 to vector<1x128xf32>
    %16 = arith.mulf %1, %15 : vector<1x128xf32>
    %c1_7 = arith.constant 1 : index
    %17 = memref.load %arg3[%c1_7] : memref<3xf32, #tpu.memory_space<smem>>
    %18 = vector.broadcast %17 : f32 to vector<1x128xf32>
    %19 = arith.addf %16, %18 : vector<1x128xf32>
    %c1_8 = arith.constant 1 : index
    %c1_9 = arith.constant 1 : index
    %20 = memref.load %arg2[%c1_8, %c1_9] : memref<2x3xf32, #tpu.memory_space<smem>>
    %21 = vector.broadcast %20 : f32 to vector<1x128xf32>
    %22 = arith.mulf %2, %21 : vector<1x128xf32>
    %23 = arith.addf %19, %22 : vector<1x128xf32>
    %24 = math.tanh %23 : vector<1x128xf32>
    %c0_10 = arith.constant 0 : index
    %c2 = arith.constant 2 : index
    %25 = memref.load %arg2[%c0_10, %c2] : memref<2x3xf32, #tpu.memory_space<smem>>
    %26 = vector.broadcast %25 : f32 to vector<1x128xf32>
    %27 = arith.mulf %1, %26 : vector<1x128xf32>
    %c2_11 = arith.constant 2 : index
    %28 = memref.load %arg3[%c2_11] : memref<3xf32, #tpu.memory_space<smem>>
    %29 = vector.broadcast %28 : f32 to vector<1x128xf32>
    %30 = arith.addf %27, %29 : vector<1x128xf32>
    %c1_12 = arith.constant 1 : index
    %c2_13 = arith.constant 2 : index
    %31 = memref.load %arg2[%c1_12, %c2_13] : memref<2x3xf32, #tpu.memory_space<smem>>
    %32 = vector.broadcast %31 : f32 to vector<1x128xf32>
    %33 = arith.mulf %2, %32 : vector<1x128xf32>
    %34 = arith.addf %30, %33 : vector<1x128xf32>
    %35 = math.tanh %34 : vector<1x128xf32>
    %c0_14 = arith.constant 0 : index
    %c0_15 = arith.constant 0 : index
    %36 = memref.load %arg4[%c0_14, %c0_15] : memref<3x3xf32, #tpu.memory_space<smem>>
    %37 = vector.broadcast %36 : f32 to vector<1x128xf32>
    %38 = arith.mulf %13, %37 : vector<1x128xf32>
    %c0_16 = arith.constant 0 : index
    %39 = memref.load %arg5[%c0_16] : memref<3xf32, #tpu.memory_space<smem>>
    %40 = vector.broadcast %39 : f32 to vector<1x128xf32>
    %41 = arith.addf %38, %40 : vector<1x128xf32>
    %c1_17 = arith.constant 1 : index
    %c0_18 = arith.constant 0 : index
    %42 = memref.load %arg4[%c1_17, %c0_18] : memref<3x3xf32, #tpu.memory_space<smem>>
    %43 = vector.broadcast %42 : f32 to vector<1x128xf32>
    %44 = arith.mulf %24, %43 : vector<1x128xf32>
    %45 = arith.addf %41, %44 : vector<1x128xf32>
    %c2_19 = arith.constant 2 : index
    %c0_20 = arith.constant 0 : index
    %46 = memref.load %arg4[%c2_19, %c0_20] : memref<3x3xf32, #tpu.memory_space<smem>>
    %47 = vector.broadcast %46 : f32 to vector<1x128xf32>
    %48 = arith.mulf %35, %47 : vector<1x128xf32>
    %49 = arith.addf %45, %48 : vector<1x128xf32>
    %50 = math.tanh %49 : vector<1x128xf32>
    %c0_21 = arith.constant 0 : index
    %c1_22 = arith.constant 1 : index
    %51 = memref.load %arg4[%c0_21, %c1_22] : memref<3x3xf32, #tpu.memory_space<smem>>
    %52 = vector.broadcast %51 : f32 to vector<1x128xf32>
    %53 = arith.mulf %13, %52 : vector<1x128xf32>
    %c1_23 = arith.constant 1 : index
    %54 = memref.load %arg5[%c1_23] : memref<3xf32, #tpu.memory_space<smem>>
    %55 = vector.broadcast %54 : f32 to vector<1x128xf32>
    %56 = arith.addf %53, %55 : vector<1x128xf32>
    %c1_24 = arith.constant 1 : index
    %c1_25 = arith.constant 1 : index
    %57 = memref.load %arg4[%c1_24, %c1_25] : memref<3x3xf32, #tpu.memory_space<smem>>
    %58 = vector.broadcast %57 : f32 to vector<1x128xf32>
    %59 = arith.mulf %24, %58 : vector<1x128xf32>
    %60 = arith.addf %56, %59 : vector<1x128xf32>
    %c2_26 = arith.constant 2 : index
    %c1_27 = arith.constant 1 : index
    %61 = memref.load %arg4[%c2_26, %c1_27] : memref<3x3xf32, #tpu.memory_space<smem>>
    %62 = vector.broadcast %61 : f32 to vector<1x128xf32>
    %63 = arith.mulf %35, %62 : vector<1x128xf32>
    %64 = arith.addf %60, %63 : vector<1x128xf32>
    %65 = math.tanh %64 : vector<1x128xf32>
    %c0_28 = arith.constant 0 : index
    %c2_29 = arith.constant 2 : index
    %66 = memref.load %arg4[%c0_28, %c2_29] : memref<3x3xf32, #tpu.memory_space<smem>>
    %67 = vector.broadcast %66 : f32 to vector<1x128xf32>
    %68 = arith.mulf %13, %67 : vector<1x128xf32>
    %c2_30 = arith.constant 2 : index
    %69 = memref.load %arg5[%c2_30] : memref<3xf32, #tpu.memory_space<smem>>
    %70 = vector.broadcast %69 : f32 to vector<1x128xf32>
    %71 = arith.addf %68, %70 : vector<1x128xf32>
    %c1_31 = arith.constant 1 : index
    %c2_32 = arith.constant 2 : index
    %72 = memref.load %arg4[%c1_31, %c2_32] : memref<3x3xf32, #tpu.memory_space<smem>>
    %73 = vector.broadcast %72 : f32 to vector<1x128xf32>
    %74 = arith.mulf %24, %73 : vector<1x128xf32>
    %75 = arith.addf %71, %74 : vector<1x128xf32>
    %c2_33 = arith.constant 2 : index
    %c2_34 = arith.constant 2 : index
    %76 = memref.load %arg4[%c2_33, %c2_34] : memref<3x3xf32, #tpu.memory_space<smem>>
    %77 = vector.broadcast %76 : f32 to vector<1x128xf32>
    %78 = arith.mulf %35, %77 : vector<1x128xf32>
    %79 = arith.addf %75, %78 : vector<1x128xf32>
    %80 = math.tanh %79 : vector<1x128xf32>
    %c0_35 = arith.constant 0 : index
    %c0_36 = arith.constant 0 : index
    %81 = memref.load %arg6[%c0_35, %c0_36] : memref<3x1xf32, #tpu.memory_space<smem>>
    %82 = vector.broadcast %81 : f32 to vector<1x128xf32>
    %83 = arith.mulf %50, %82 : vector<1x128xf32>
    %c0_37 = arith.constant 0 : index
    %84 = memref.load %arg7[%c0_37] : memref<1xf32, #tpu.memory_space<smem>>
    %85 = vector.broadcast %84 : f32 to vector<1x128xf32>
    %86 = arith.addf %83, %85 : vector<1x128xf32>
    %c1_38 = arith.constant 1 : index
    %c0_39 = arith.constant 0 : index
    %87 = memref.load %arg6[%c1_38, %c0_39] : memref<3x1xf32, #tpu.memory_space<smem>>
    %88 = vector.broadcast %87 : f32 to vector<1x128xf32>
    %89 = arith.mulf %65, %88 : vector<1x128xf32>
    %90 = arith.addf %86, %89 : vector<1x128xf32>
    %c2_40 = arith.constant 2 : index
    %c0_41 = arith.constant 0 : index
    %91 = memref.load %arg6[%c2_40, %c0_41] : memref<3x1xf32, #tpu.memory_space<smem>>
    %92 = vector.broadcast %91 : f32 to vector<1x128xf32>
    %93 = arith.mulf %80, %92 : vector<1x128xf32>
    %94 = arith.addf %90, %93 : vector<1x128xf32>
    %95 = math.tanh %94 : vector<1x128xf32>
    %c0_42 = arith.constant 0 : index
    %c0_43 = arith.constant 0 : index
    %96 = vector.load %arg8[%c0_42, %c0_43] : memref<1x128xf32, #tpu.memory_space<vmem>>, vector<1x128xf32>
    tpu.vector_store %arg8[%c0_42, %c0_43], %95 {strides = array<i32>} : memref<1x128xf32, #tpu.memory_space<vmem>>, vector<1x128xf32>,
    return
  }
  func.func @transform_0(%arg0: i32) -> (i32, i32) {
    %c0_i32 = arith.constant 0 : i32
    %c0_i32_0 = arith.constant 0 : i32
    return %c0_i32, %arg0 : i32, i32
  }
  func.func @transform_1(%arg0: i32) -> (i32, i32) {
    %c0_i32 = arith.constant 0 : i32
    %c0_i32_0 = arith.constant 0 : i32
    %c0_i32_1 = arith.constant 0 : i32
    return %c0_i32, %c0_i32_0 : i32, i32
  }
  func.func @transform_2(%arg0: i32) -> i32 {
    %c0_i32 = arith.constant 0 : i32
    %c0_i32_0 = arith.constant 0 : i32
    return %c0_i32 : i32
  }
  func.func @transform_3(%arg0: i32) -> (i32, i32) {
    %c0_i32 = arith.constant 0 : i32
    %c0_i32_0 = arith.constant 0 : i32
    %c0_i32_1 = arith.constant 0 : i32
    return %c0_i32, %c0_i32_0 : i32, i32
  }
  func.func @transform_4(%arg0: i32) -> i32 {
    %c0_i32 = arith.constant 0 : i32
    %c0_i32_0 = arith.constant 0 : i32
    return %c0_i32 : i32
  }
  func.func @transform_5(%arg0: i32) -> (i32, i32) {
    %c0_i32 = arith.constant 0 : i32
    %c0_i32_0 = arith.constant 0 : i32
    %c0_i32_1 = arith.constant 0 : i32
    return %c0_i32, %c0_i32_0 : i32, i32
  }
  func.func @transform_6(%arg0: i32) -> i32 {
    %c0_i32 = arith.constant 0 : i32
    %c0_i32_0 = arith.constant 0 : i32
    return %c0_i32 : i32
  }
  func.func @transform_7(%arg0: i32) -> (i32, i32) {
    %c0_i32 = arith.constant 0 : i32
    %c0_i32_0 = arith.constant 0 : i32
    return %c0_i32, %arg0 : i32, i32
  }
}

</mosaic_0001>

<llo_original>
// kernel: tpu_custom_call.1
$region0: #{tpu_custom_call.1}
  #allocation0 [shape = 'u32[]', space=smem, size = 0x4, offset = 0x4, fixed_abs, tag = 'smem constant byte address 0x4 - core index']
  #allocation1 [shape = 'u32[72,128]{1,0:T(1,128)}', space=vmem, size = 0x9000, scoped, tag = 'internal scratch']
  #allocation2 [shape = 'f32[1]{0:T(128)S(6)}', space=smem, size = 0x200, scoped, tag = 'scoped memory for tpu_custom_call.1']
  %s0 = inlined_call_operand.hbm [shape: f32[2,512], index: 0, kind: input, shape index: {}]
  %s1 = inlined_call_operand.vmem [shape: f32[2,3], index: 1, kind: input, shape index: {}]
  %s2 = inlined_call_operand.vmem [shape: f32[3], index: 2, kind: input, shape index: {}]
  %s3 = inlined_call_operand.vmem [shape: f32[3,3], index: 3, kind: input, shape index: {}]
  %s4 = inlined_call_operand.vmem [shape: f32[3], index: 4, kind: input, shape index: {}]
  %s5 = inlined_call_operand.vmem [shape: f32[3,1], index: 5, kind: input, shape index: {}]
  %s6 = inlined_call_operand.<no memory space> [shape: f32[1], index: 6, kind: input, shape index: {}]
  %s7 = inlined_call_operand.hbm [shape: f32[1,512], index: 7, kind: output, shape index: {}]
  %s8 = sld [smem:[#allocation0]]
  $region85: #{tpu_custom_call.1} parent=0
    _
  %s10 = ssub.s32 1, %s8
  %s11 = scalar_select 0, %s10, %s8
  %12 = sst [smem:[#allocation2]] %s6
  $region1: #{tpu_custom_call.1} parent=0
    #allocation3 [shape = 'u8[2048]{0}', space=vmem, size = 0x800, scoped, tag = 'input window, operand 0']
    #allocation4 [shape = 's32[2]{0}', space=sflag, size = 0x8, scoped, tag = 'scoped memory for tpu_custom_call.1']
    #allocation5 [shape = 's32[2]{0}', space=sflag, size = 0x8, scoped, tag = 'scoped memory for tpu_custom_call.1']
    #allocation6 [shape = 's32[2]{0}', space=sflag, size = 0x8, scoped, tag = 'scoped memory for tpu_custom_call.1']
    #allocation7 [shape = 'u8[1024]{0}', space=smem, size = 0x400, scoped, tag = 'input window, operand 1, single buffered']
    #allocation8 [shape = 'u8[512]{0}', space=smem, size = 0x200, scoped, tag = 'input window, operand 2, single buffered']
    #allocation9 [shape = 's32[1]{0}', space=sflag, size = 0x4, scoped, tag = 'scoped memory for tpu_custom_call.1']
    #allocation10 [shape = 'u8[2048]{0}', space=smem, size = 0x800, scoped, tag = 'input window, operand 3, single buffered']
    #allocation11 [shape = 'u8[512]{0}', space=smem, size = 0x200, scoped, tag = 'input window, operand 4, single buffered']
    #allocation12 [shape = 's32[1]{0}', space=sflag, size = 0x4, scoped, tag = 'scoped memory for tpu_custom_call.1']
    #allocation13 [shape = 'u8[2048]{0}', space=smem, size = 0x800, scoped, tag = 'input window, operand 5, single buffered']
    #allocation14 [shape = 'u8[1024]{0}', space=vmem, size = 0x400, scoped, tag = 'output window, operand 0']
    %13 = vsyncpa [#allocation4], 0
    %s14 = scalar_lea.sflag [#allocation4], 1
    %15 = vsyncpa %s14, 0
    %16 = vsyncpa [#allocation6], 0
    %17 = vsyncpa [#allocation9], 0
    %18 = vsyncpa [#allocation12], 0
    %19 = vsyncpa [#allocation5], 0
    %s20 = scalar_lea.sflag [#allocation5], 1
    %21 = vsyncpa %s20, 0
    loop: start=0, step=1, limit=6
    $region2: #{tpu_custom_call.1} parent=1 // loop_pre_header
      _
    $region3: #{tpu_custom_call.1} parent=1 // loop_header
      %s23 = sphi 0, %s27
      %p24 = scmp.ge.s32.totalorder %s23, 6
      %s33 = sphi 0, %s35
      %s36 = sphi 0, %s33
      %s37 = sphi 0, %s36
      %s53 = sphi 0, %s37
      %s57 = sphi 0, %s57
      %s59 = sphi 0, %s57
      %s60 = sphi 0, %s59
      %s74 = sphi 0, %s60
      %s78 = sphi 0, %s78
      %s80 = sphi 0, %s78
      %s81 = sphi 0, %s80
      %s95 = sphi 0, %s81
      %s99 = sphi 0, %s99
      %s101 = sphi 0, %s99
      %s102 = sphi 0, %s101
      %s116 = sphi 0, %s102
      %s120 = sphi 0, %s120
      %s122 = sphi 0, %s120
      %s123 = sphi 0, %s122
      %s137 = sphi 0, %s123
      %s141 = sphi 0, %s141
      %s143 = sphi 0, %s141
      %s144 = sphi 0, %s143
      %s158 = sphi 0, %s144
      %s162 = sphi 0, %s162
      %s164 = sphi 0, %s162
      %s165 = sphi 0, %s164
      %s179 = sphi 0, %s165
      %s185 = sphi 0, %s187
      %s188 = sphi 0, %s185
      %s189 = sphi 0, %s188
      %s205 = sphi 0, %s189
    $region4: #{tpu_custom_call.1} parent=1 // loop_header_branch
      %26 = sbr.rel (%p24) target = $region8
    $region5: #{tpu_custom_call.1} parent=1 // loop_body
      %s28 = ssub.s32 %s23, 1
      %s29 = ssub.s32 %s23, 2
      %s30 = sadd.s32 %s23, 1
      %s31 = ssub.s32 %s23, %s30
      %p32 = scmp.eq.s32.totalorder %s31, 0
      %s34 = sadd.s32 %s33, 1
      %s35 = scalar_select %p32, %s33, %s34
      %p38 = pneg %p32
      %p39 = scmp.eq.s32.totalorder %s23, 3
      %p40 = por %p38, %p39
      %p41 = scmp.ne.s32.totalorder %s33, %s36
      %p42 = scmp.eq.s32.totalorder %s23, 0
      %p43 = por %p41, %p42
      %p44 = scmp.ne.s32.totalorder %s33, %s36
      %p45 = scmp.eq.s32.totalorder %s28, 3
      %p46 = por %p44, %p45
      %p47 = scmp.ne.s32.totalorder %s36, %s37
      %p48 = scmp.eq.s32.totalorder %s28, 0
      %p49 = por %p47, %p48
      %p50 = scmp.ne.s32.totalorder %s36, %s37
      %p51 = scmp.eq.s32.totalorder %s29, 3
      %p52 = por %p50, %p51
      %p54 = scmp.ne.s32.totalorder %s37, %s53
      %p55 = scmp.eq.s32.totalorder %s29, 0
      %p56 = por %p54, %p55
      %s58 = sadd.s32 %s57, 1
      %p61 = scmp.eq.s32.totalorder %s23, 3
      %p62 = scmp.ne.s32.totalorder %s57, %s59
      %p63 = scmp.eq.s32.totalorder %s23, 0
      %p64 = por %p62, %p63
      %p65 = scmp.ne.s32.totalorder %s57, %s59
      %p66 = scmp.eq.s32.totalorder %s28, 3
      %p67 = por %p65, %p66
      %p68 = scmp.ne.s32.totalorder %s59, %s60
      %p69 = scmp.eq.s32.totalorder %s28, 0
      %p70 = por %p68, %p69
      %p71 = scmp.ne.s32.totalorder %s59, %s60
      %p72 = scmp.eq.s32.totalorder %s29, 3
      %p73 = por %p71, %p72
      %p75 = scmp.ne.s32.totalorder %s60, %s74
      %p76 = scmp.eq.s32.totalorder %s29, 0
      %p77 = por %p75, %p76
      %s79 = sadd.s32 %s78, 1
      %p82 = scmp.eq.s32.totalorder %s23, 3
      %p83 = scmp.ne.s32.totalorder %s78, %s80
      %p84 = scmp.eq.s32.totalorder %s23, 0
      %p85 = por %p83, %p84
      %p86 = scmp.ne.s32.totalorder %s78, %s80
      %p87 = scmp.eq.s32.totalorder %s28, 3
      %p88 = por %p86, %p87
      %p89 = scmp.ne.s32.totalorder %s80, %s81
      %p90 = scmp.eq.s32.totalorder %s28, 0
      %p91 = por %p89, %p90
      %p92 = scmp.ne.s32.totalorder %s80, %s81
      %p93 = scmp.eq.s32.totalorder %s29, 3
      %p94 = por %p92, %p93
      %p96 = scmp.ne.s32.totalorder %s81, %s95
      %p97 = scmp.eq.s32.totalorder %s29, 0
      %p98 = por %p96, %p97
      %s100 = sadd.s32 %s99, 1
      %p103 = scmp.eq.s32.totalorder %s23, 3
      %p104 = scmp.ne.s32.totalorder %s99, %s101
      %p105 = scmp.eq.s32.totalorder %s23, 0
      %p106 = por %p104, %p105
      %p107 = scmp.ne.s32.totalorder %s99, %s101
      %p108 = scmp.eq.s32.totalorder %s28, 3
      %p109 = por %p107, %p108
      %p110 = scmp.ne.s32.totalorder %s101, %s102
      %p111 = scmp.eq.s32.totalorder %s28, 0
      %p112 = por %p110, %p111
      %p113 = scmp.ne.s32.totalorder %s101, %s102
      %p114 = scmp.eq.s32.totalorder %s29, 3
      %p115 = por %p113, %p114
      %p117 = scmp.ne.s32.totalorder %s102, %s116
      %p118 = scmp.eq.s32.totalorder %s29, 0
      %p119 = por %p117, %p118
      %s121 = sadd.s32 %s120, 1
      %p124 = scmp.eq.s32.totalorder %s23, 3
      %p125 = scmp.ne.s32.totalorder %s120, %s122
      %p126 = scmp.eq.s32.totalorder %s23, 0
      %p127 = por %p125, %p126
      %p128 = scmp.ne.s32.totalorder %s120, %s122
      %p129 = scmp.eq.s32.totalorder %s28, 3
      %p130 = por %p128, %p129
      %p131 = scmp.ne.s32.totalorder %s122, %s123
      %p132 = scmp.eq.s32.totalorder %s28, 0
      %p133 = por %p131, %p132
      %p134 = scmp.ne.s32.totalorder %s122, %s123
      %p135 = scmp.eq.s32.totalorder %s29, 3
      %p136 = por %p134, %p135
      %p138 = scmp.ne.s32.totalorder %s123, %s137
      %p139 = scmp.eq.s32.totalorder %s29, 0
      %p140 = por %p138, %p139
      %s142 = sadd.s32 %s141, 1
      %p145 = scmp.eq.s32.totalorder %s23, 3
      %p146 = scmp.ne.s32.totalorder %s141, %s143
      %p147 = scmp.eq.s32.totalorder %s23, 0
      %p148 = por %p146, %p147
      %p149 = scmp.ne.s32.totalorder %s141, %s143
      %p150 = scmp.eq.s32.totalorder %s28, 3
      %p151 = por %p149, %p150
      %p152 = scmp.ne.s32.totalorder %s143, %s144
      %p153 = scmp.eq.s32.totalorder %s28, 0
      %p154 = por %p152, %p153
      %p155 = scmp.ne.s32.totalorder %s143, %s144
      %p156 = scmp.eq.s32.totalorder %s29, 3
      %p157 = por %p155, %p156
      %p159 = scmp.ne.s32.totalorder %s144, %s158
      %p160 = scmp.eq.s32.totalorder %s29, 0
      %p161 = por %p159, %p160
      %s163 = sadd.s32 %s162, 1
      %p166 = scmp.eq.s32.totalorder %s23, 3
      %p167 = scmp.ne.s32.totalorder %s162, %s164
      %p168 = scmp.eq.s32.totalorder %s23, 0
      %p169 = por %p167, %p168
      %p170 = scmp.ne.s32.totalorder %s162, %s164
      %p171 = scmp.eq.s32.totalorder %s28, 3
      %p172 = por %p170, %p171
      %p173 = scmp.ne.s32.totalorder %s164, %s165
      %p174 = scmp.eq.s32.totalorder %s28, 0
      %p175 = por %p173, %p174
      %p176 = scmp.ne.s32.totalorder %s164, %s165
      %p177 = scmp.eq.s32.totalorder %s29, 3
      %p178 = por %p176, %p177
      %p180 = scmp.ne.s32.totalorder %s165, %s179
      %p181 = scmp.eq.s32.totalorder %s29, 0
      %p182 = por %p180, %p181
      %s183 = ssub.s32 %s23, %s30
      %p184 = scmp.eq.s32.totalorder %s183, 0
      %s186 = sadd.s32 %s185, 1
      %s187 = scalar_select %p184, %s185, %s186
      %p190 = pneg %p184
      %p191 = scmp.eq.s32.totalorder %s23, 3
      %p192 = por %p190, %p191
      %p193 = scmp.ne.s32.totalorder %s185, %s188
      %p194 = scmp.eq.s32.totalorder %s23, 0
      %p195 = por %p193, %p194
      %p196 = scmp.ne.s32.totalorder %s185, %s188
      %p197 = scmp.eq.s32.totalorder %s28, 3
      %p198 = por %p196, %p197
      %p199 = scmp.ne.s32.totalorder %s188, %s189
      %p200 = scmp.eq.s32.totalorder %s28, 0
      %p201 = por %p199, %p200
      %p202 = scmp.ne.s32.totalorder %s188, %s189
      %p203 = scmp.eq.s32.totalorder %s29, 3
      %p204 = por %p202, %p203
      %p206 = scmp.ne.s32.totalorder %s189, %s205
      %p207 = scmp.eq.s32.totalorder %s29, 0
      %p208 = por %p206, %p207
      %p209 = scmp.le.s32.totalorder 1, %s23
      %p210 = scmp.lt.s32.totalorder %s23, 5
      %p211 = pnand %p209, %p210
      %p212 = pneg %p211
      // Predicated region
      $region9: #{tpu_custom_call.1} parent=5 // pred_check
        _
      $region10: #{tpu_custom_call.1} parent=5 // pred_check_branch
        %214 = sbr.rel (%p211) target = $region12
      $region11: #{tpu_custom_call.1} parent=5 // pred_region
        %s215 = ssub.s32 %s23, 1
        // Predicated region
        $region13: #{tpu_custom_call.1} parent=11 // pred_check
          %p216 = pneg %p70
        $region14: #{tpu_custom_call.1} parent=11 // pred_check_branch
          %218 = sbr.rel (%p216) target = $region16
        $region15: #{tpu_custom_call.1} parent=11 // pred_region
          %220 = vsyncadd [#allocation6], 0
          %s222 = sshll.u32 %s1, 4
          %s223 = int_to_ptr.vmem [resolvable:$true] %s222
          %225 = dma.vmem_to_smem %s223, 32, [#allocation7], [#allocation6]
        $region16: #{tpu_custom_call.1} parent=11 // pred_fallthru
          _
        // Predicated region
        $region17: #{tpu_custom_call.1} parent=11 // pred_check
          %p226 = pneg %p91
        $region18: #{tpu_custom_call.1} parent=11 // pred_check_branch
          %228 = sbr.rel (%p226) target = $region20
        $region19: #{tpu_custom_call.1} parent=11 // pred_region
          %230 = vsyncadd [#allocation9], 0
          %s232 = sshll.u32 %s2, 4
          %s233 = int_to_ptr.vmem [resolvable:$true] %s232
          %235 = dma.vmem_to_smem %s233, 16, [#allocation8], [#allocation9]
        $region20: #{tpu_custom_call.1} parent=11 // pred_fallthru
          _
        // Predicated region
        $region21: #{tpu_custom_call.1} parent=11 // pred_check
          %p236 = pneg %p112
        $region22: #{tpu_custom_call.1} parent=11 // pred_check_branch
          %238 = sbr.rel (%p236) target = $region24
        $region23: #{tpu_custom_call.1} parent=11 // pred_region
          %240 = vsyncadd [#allocation9], 0
          %s242 = sshll.u32 %s3, 4
          %s243 = int_to_ptr.vmem [resolvable:$true] %s242
          %245 = dma.vmem_to_smem %s243, 64, [#allocation10], [#allocation9]
        $region24: #{tpu_custom_call.1} parent=11 // pred_fallthru
          _
        // Predicated region
        $region25: #{tpu_custom_call.1} parent=11 // pred_check
          %p246 = pneg %p133
        $region26: #{tpu_custom_call.1} parent=11 // pred_check_branch
          %248 = sbr.rel (%p246) target = $region28
        $region27: #{tpu_custom_call.1} parent=11 // pred_region
          %250 = vsyncadd [#allocation12], 0
          %s252 = sshll.u32 %s4, 4
          %s253 = int_to_ptr.vmem [resolvable:$true] %s252
          %255 = dma.vmem_to_smem %s253, 16, [#allocation11], [#allocation12]
        $region28: #{tpu_custom_call.1} parent=11 // pred_fallthru
          _
        // Predicated region
        $region29: #{tpu_custom_call.1} parent=11 // pred_check
          %p256 = pneg %p154
        $region30: #{tpu_custom_call.1} parent=11 // pred_check_branch
          %258 = sbr.rel (%p256) target = $region32
        $region31: #{tpu_custom_call.1} parent=11 // pred_region
          %260 = vsyncadd [#allocation12], 0
          %s262 = sshll.u32 %s5, 4
          %s263 = int_to_ptr.vmem [resolvable:$true] %s262
          %265 = dma.vmem_to_smem %s263, 64, [#allocation13], [#allocation12]
        $region32: #{tpu_custom_call.1} parent=11 // pred_fallthru
          _
        // Predicated region
        $region33: #{tpu_custom_call.1} parent=11 // pred_check
          %p266 = pneg %p175
        $region34: #{tpu_custom_call.1} parent=11 // pred_check_branch
          %268 = sbr.rel (%p266) target = $region36
        $region35: #{tpu_custom_call.1} parent=11 // pred_region
          _
        $region36: #{tpu_custom_call.1} parent=11 // pred_fallthru
          _
      $region12: #{tpu_custom_call.1} parent=5 // pred_fallthru
        _
      %p269 = scmp.lt.s32.totalorder %s23, 4
      // Predicated region
      $region37: #{tpu_custom_call.1} parent=5 // pred_check
        %p270 = pneg %p269
      $region38: #{tpu_custom_call.1} parent=5 // pred_check_branch
        %272 = sbr.rel (%p270) target = $region40
      $region39: #{tpu_custom_call.1} parent=5 // pred_region
        // Predicated region
        $region41: #{tpu_custom_call.1} parent=39 // pred_check
          %p273 = pneg %p43
        $region42: #{tpu_custom_call.1} parent=39 // pred_check_branch
          %275 = sbr.rel (%p273) target = $region44
        $region43: #{tpu_custom_call.1} parent=39 // pred_region
          %s276 = sand.u32 %s33, 1
          %s277 = scalar_lea.sflag [#allocation4], %s276
          %s278 = sand.u32 %s33, 1
          %s279 = smul.addr %s278, 2
          %s280 = scalar_lea.vmem [#allocation3], %s279
          %282 = vsyncadd %s277, 0
          %s283 = smul.addr %s23, 2
          %s284 = scalar_lea.hbm %s0, %s283
          %s286 = sshll.u32 %s284, 4
          %s287 = int_to_ptr.hbm [resolvable:$true] %s286
          %s288 = sshll.u32 %s280, 4
          %s289 = int_to_ptr.vmem [resolvable:$true] %s288
          %291 = dma.hbm_to_vmem [thread:$0]  %s287, 32, %s289, %s277
        $region44: #{tpu_custom_call.1} parent=39 // pred_fallthru
          _
      $region40: #{tpu_custom_call.1} parent=5 // pred_fallthru
        _
      %p292 = scmp.le.s32.totalorder 1, %s23
      %p293 = scmp.lt.s32.totalorder %s23, 5
      %p294 = pnand %p292, %p293
      %p295 = pneg %p294
      // Predicated region
      $region45: #{tpu_custom_call.1} parent=5 // pred_check
        _
      $region46: #{tpu_custom_call.1} parent=5 // pred_check_branch
        %297 = sbr.rel (%p294) target = $region48
      $region47: #{tpu_custom_call.1} parent=5 // pred_region
        %s298 = ssub.s32 %s23, 1
        %s299 = sand.u32 %s36, 1
        %s300 = scalar_lea.sflag [#allocation4], %s299
        %s301 = sand.u32 %s36, 1
        %s302 = smul.addr %s301, 2
        %s303 = scalar_lea.vmem [#allocation3], %s302
        // Predicated region
        $region49: #{tpu_custom_call.1} parent=47 // pred_check
          %p304 = pneg %p49
        $region50: #{tpu_custom_call.1} parent=47 // pred_check_branch
          %306 = sbr.rel (%p304) target = $region52
        $region51: #{tpu_custom_call.1} parent=47 // pred_region
          %308 = dma.done %s300, 32
        $region52: #{tpu_custom_call.1} parent=47 // pred_fallthru
          _
        // Predicated region
        $region53: #{tpu_custom_call.1} parent=47 // pred_check
          %p309 = pneg %p70
        $region54: #{tpu_custom_call.1} parent=47 // pred_check_branch
          %311 = sbr.rel (%p309) target = $region56
        $region55: #{tpu_custom_call.1} parent=47 // pred_region
          %313 = dma.done [#allocation6], 32
        $region56: #{tpu_custom_call.1} parent=47 // pred_fallthru
          _
        // Predicated region
        $region57: #{tpu_custom_call.1} parent=47 // pred_check
          %p314 = pneg %p91
        $region58: #{tpu_custom_call.1} parent=47 // pred_check_branch
          %316 = sbr.rel (%p314) target = $region60
        $region59: #{tpu_custom_call.1} parent=47 // pred_region
          %318 = dma.done [#allocation9], 16
        $region60: #{tpu_custom_call.1} parent=47 // pred_fallthru
          _
        // Predicated region
        $region61: #{tpu_custom_call.1} parent=47 // pred_check
          %p319 = pneg %p112
        $region62: #{tpu_custom_call.1} parent=47 // pred_check_branch
          %321 = sbr.rel (%p319) target = $region64
        $region63: #{tpu_custom_call.1} parent=47 // pred_region
          %323 = dma.done [#allocation9], 64
        $region64: #{tpu_custom_call.1} parent=47 // pred_fallthru
          _
        // Predicated region
        $region65: #{tpu_custom_call.1} parent=47 // pred_check
          %p324 = pneg %p133
        $region66: #{tpu_custom_call.1} parent=47 // pred_check_branch
          %326 = sbr.rel (%p324) target = $region68
        $region67: #{tpu_custom_call.1} parent=47 // pred_region
          %328 = dma.done [#allocation12], 16
        $region68: #{tpu_custom_call.1} parent=47 // pred_fallthru
          _
        // Predicated region
        $region69: #{tpu_custom_call.1} parent=47 // pred_check
          %p329 = pneg %p154
        $region70: #{tpu_custom_call.1} parent=47 // pred_check_branch
          %331 = sbr.rel (%p329) target = $region72
        $region71: #{tpu_custom_call.1} parent=47 // pred_region
          %333 = dma.done [#allocation12], 64
        $region72: #{tpu_custom_call.1} parent=47 // pred_fallthru
          _
        %334 = sfence
        %s335 = sand.u32 %s36, 1
        %s336 = scalar_lea.sflag [#allocation4], %s335
        %s337 = sand.u32 %s36, 1
        %s338 = smul.addr %s337, 2
        %s339 = scalar_lea.vmem [#allocation3], %s338
        %p340 = pneg %p49
        %p341 = pneg %p46
        %p342 = pneg %p70
        %p343 = pneg %p67
        %p344 = pneg %p91
        %p345 = pneg %p88
        %p346 = pneg %p112
        %p347 = pneg %p109
        %p348 = pneg %p133
        %p349 = pneg %p130
        %p350 = pneg %p154
        %p351 = pneg %p151
        %p352 = pneg %p175
        %p353 = pneg %p172
        %p354 = pneg %p201
        %p355 = pneg %p198
        %s356 = sand.u32 %s188, 1
        %s357 = scalar_lea.sflag [#allocation5], %s356
        %s358 = sand.u32 %s188, 1
        %s359 = scalar_lea.vmem [#allocation14], %s358
        %v360 = vld [vmem:[%s303] sm:$0x3]
        %s361 = sld [smem:[#allocation7]]
        %v362 = vstv %s361
        %v363 = vmul.f32 %v360, %v362
        %s364 = sld [smem:[#allocation8]]
        %v365 = vstv %s364
        %v366 = vadd.f32 %v363, %v365
        %s367 = sld [smem:[#allocation7 + $0x80]]
        %v368 = vstv %s367
        %v369 = vmul.f32 %v360, %v368
        %v371 = vrot.slane %v369, 1
        %v373 = vadd.f32 %v366, %v371
        %v374 = vtanh.pop %v373
        %s375 = sld [smem:[#allocation7 + $0x1]]
        %v376 = vstv %s375
        %v377 = vmul.f32 %v360, %v376
        %s378 = sld [smem:[#allocation8 + $0x1]]
        %v379 = vstv %s378
        %v380 = vadd.f32 %v377, %v379
        %s381 = sld [smem:[#allocation7 + $0x81]]
        %v382 = vstv %s381
        %v383 = vmul.f32 %v360, %v382
        %v385 = vrot.slane %v383, 1
        %v387 = vadd.f32 %v380, %v385
        %v388 = vtanh.pop %v387
        %s389 = sld [smem:[#allocation7 + $0x2]]
        %v390 = vstv %s389
        %v391 = vmul.f32 %v360, %v390
        %s392 = sld [smem:[#allocation8 + $0x2]]
        %v393 = vstv %s392
        %v394 = vadd.f32 %v391, %v393
        %s395 = sld [smem:[#allocation7 + $0x82]]
        %v396 = vstv %s395
        %v397 = vmul.f32 %v360, %v396
        %v399 = vrot.slane %v397, 1
        %v401 = vadd.f32 %v394, %v399
        %v402 = vtanh.pop %v401
        %s403 = sld [smem:[#allocation10]]
        %v404 = vstv %s403
        %v405 = vmul.f32 %v374, %v404
        %s406 = sld [smem:[#allocation11]]
        %v407 = vstv %s406
        %v408 = vadd.f32 %v405, %v407
        %s409 = sld [smem:[#allocation10 + $0x80]]
        %v410 = vstv %s409
        %v411 = vmul.f32 %v388, %v410
        %v412 = vadd.f32 %v408, %v411
        %s413 = sld [smem:[#allocation10 + $0x100]]
        %v414 = vstv %s413
        %v415 = vmul.f32 %v402, %v414
        %v416 = vadd.f32 %v412, %v415
        %v417 = vtanh.pop %v416
        %s418 = sld [smem:[#allocation10 + $0x1]]
        %v419 = vstv %s418
        %v420 = vmul.f32 %v374, %v419
        %s421 = sld [smem:[#allocation11 + $0x1]]
        %v422 = vstv %s421
        %v423 = vadd.f32 %v420, %v422
        %s424 = sld [smem:[#allocation10 + $0x81]]
        %v425 = vstv %s424
        %v426 = vmul.f32 %v388, %v425
        %v427 = vadd.f32 %v423, %v426
        %s428 = sld [smem:[#allocation10 + $0x101]]
        %v429 = vstv %s428
        %v430 = vmul.f32 %v402, %v429
        %v431 = vadd.f32 %v427, %v430
        %v432 = vtanh.pop %v431
        %s433 = sld [smem:[#allocation10 + $0x2]]
        %v434 = vstv %s433
        %v435 = vmul.f32 %v374, %v434
        %s436 = sld [smem:[#allocation11 + $0x2]]
        %v437 = vstv %s436
        %v438 = vadd.f32 %v435, %v437
        %s439 = sld [smem:[#allocation10 + $0x82]]
        %v440 = vstv %s439
        %v441 = vmul.f32 %v388, %v440
        %v442 = vadd.f32 %v438, %v441
        %s443 = sld [smem:[#allocation10 + $0x102]]
        %v444 = vstv %s443
        %v445 = vmul.f32 %v402, %v444
        %v446 = vadd.f32 %v442, %v445
        %v447 = vtanh.pop %v446
        %s448 = sld [smem:[#allocation13]]
        %v449 = vstv %s448
        %v450 = vmul.f32 %v417, %v449
        %s451 = sld [smem:[#allocation2]]
        %v452 = vstv %s451
        %v453 = vadd.f32 %v450, %v452
        %s454 = sld [smem:[#allocation13 + $0x80]]
        %v455 = vstv %s454
        %v456 = vmul.f32 %v432, %v455
        %v457 = vadd.f32 %v453, %v456
        %s458 = sld [smem:[#allocation13 + $0x100]]
        %v459 = vstv %s458
        %v460 = vmul.f32 %v447, %v459
        %v461 = vadd.f32 %v457, %v460
        %v462 = vtanh.pop %v461
        %463 = vst [vmem:[%s359] sm:$0x1] %v462
        %s464 = sand.u32 %s188, 1
        %s465 = scalar_lea.sflag [#allocation5], %s464
        %s466 = sand.u32 %s188, 1
        %s467 = scalar_lea.vmem [#allocation14], %s466
        // Predicated region
        $region73: #{tpu_custom_call.1} parent=47 // pred_check
          %p468 = pneg %p198
        $region74: #{tpu_custom_call.1} parent=47 // pred_check_branch
          %470 = sbr.rel (%p468) target = $region76
        $region75: #{tpu_custom_call.1} parent=47 // pred_region
          %472 = vsyncadd %s465, 0
          %s473 = scalar_lea.hbm %s7, %s28
          %s475 = sshll.u32 %s467, 4
          %s476 = int_to_ptr.vmem [resolvable:$true] %s475
          %s477 = sshll.u32 %s473, 4
          %s478 = int_to_ptr.hbm [resolvable:$true] %s477
          %480 = dma.vmem_to_hbm [thread:$0]  %s476, 16, %s478, %s465
        $region76: #{tpu_custom_call.1} parent=47 // pred_fallthru
          _
      $region48: #{tpu_custom_call.1} parent=5 // pred_fallthru
        _
      %p481 = scmp.le.s32.totalorder 2, %s23
      // Predicated region
      $region77: #{tpu_custom_call.1} parent=5 // pred_check
        %p482 = pneg %p481
      $region78: #{tpu_custom_call.1} parent=5 // pred_check_branch
        %484 = sbr.rel (%p482) target = $region80
      $region79: #{tpu_custom_call.1} parent=5 // pred_region
        %s485 = ssub.s32 %s23, 2
        // Predicated region
        $region81: #{tpu_custom_call.1} parent=79 // pred_check
          %p486 = pneg %p204
        $region82: #{tpu_custom_call.1} parent=79 // pred_check_branch
          %488 = sbr.rel (%p486) target = $region84
        $region83: #{tpu_custom_call.1} parent=79 // pred_region
          %s489 = sand.u32 %s189, 1
          %s490 = scalar_lea.sflag [#allocation5], %s489
          %s491 = sand.u32 %s189, 1
          %s492 = scalar_lea.vmem [#allocation14], %s491
          %494 = dma.done %s490, 16
        $region84: #{tpu_custom_call.1} parent=79 // pred_fallthru
          _
      $region80: #{tpu_custom_call.1} parent=5 // pred_fallthru
        _
    $region6: #{tpu_custom_call.1} parent=1 // loop_footer
      %s27 = sadd.s32 1, %s23
    $region7: #{tpu_custom_call.1} parent=1 // loop_footer_branch
      %22 = sbr.rel target = $region3
    $region8: #{tpu_custom_call.1} parent=1 // loop_exit
      _
    %495 = vsyncpa [#allocation4], 1
    %s496 = scalar_lea.sflag [#allocation4], 1
    %497 = vsyncpa %s496, 1
    %498 = vsyncpa [#allocation5], 1
    %s499 = scalar_lea.sflag [#allocation5], 1
    %500 = vsyncpa %s499, 1
    %501 = vsyncpa [#allocation6], 1
    %s502 = scalar_lea.sflag [#allocation6], 1
    %503 = vsyncpa %s502, 1
    %504 = vsyncpa [#allocation9], 1
    %505 = vsyncpa [#allocation12], 1

</llo_original>
